<compile_context>
chip_gen: v5e
topology: v5e:2x2
jax: 0.10.0
libtpu: 0.0.40
codegen_flags: <defaults>
</compile_context>

<pallas_src>
import functools
import math

import jax
import jax.numpy as jnp
from jax.experimental import pallas as pl
from jax.experimental.pallas import tpu as pltpu

NUM_BLOCKS = 4


def _round_up(n, m):
    return ((n + m - 1) // m) * m


# --------------------------- Pallas kernel ---------------------------------
def _mmnn4_kernel(x_ref, c1_ref, cb1_ref, c2_ref, cb2_ref, c3_ref, cb3_ref,
                  c4_ref, cb4_ref, fw_ref, fb_ref, out_ref, *, T):
    x = x_ref[...].astype(jnp.float32)          # (Bt, T)
    acc = jnp.zeros_like(x)                     # running sum of signals
    noise = jnp.zeros_like(x)                   # noise from previous block
    for blk in range(NUM_BLOCKS):               # static unroll over 4 blocks
        u = x - noise                           # (Bt, T)
        # conv1: (Bt, T) @ (T, C*T)
        h = jnp.maximum(
            jnp.dot(u, c1_ref[blk], preferred_element_type=jnp.float32)
            + cb1_ref[blk], 0.0)
        # conv2..4 with residual adds: (Bt, C*T) @ (C*T, C*T)
        h = jnp.maximum(
            jnp.dot(h, c2_ref[blk], preferred_element_type=jnp.float32)
            + cb2_ref[blk] + h, 0.0)
        h = jnp.maximum(
            jnp.dot(h, c3_ref[blk], preferred_element_type=jnp.float32)
            + cb3_ref[blk] + h, 0.0)
        h = jnp.maximum(
            jnp.dot(h, c4_ref[blk], preferred_element_type=jnp.float32)
            + cb4_ref[blk] + h, 0.0)
        # fused fc_1 / fc_2 heads: (Bt, C*T) @ (C*T, 2T)
        sn = (jnp.dot(h, fw_ref[blk], preferred_element_type=jnp.float32)
              + fb_ref[blk])                    # (Bt, 2T)
        acc = acc + sn[:, :T]                   # signal
        noise = sn[:, T:]                       # noise
    out_ref[...] = acc.astype(out_ref.dtype)


def mmnn4_forward(x, kp, *, C, K, T, bt=128):
    """x: (B, T) -> (B, T). kp: kernel-layout parameters (see init_params)."""
    del C, K  # folded into the precomputed conv operators
    B = x.shape[0]
    Bt = min(bt, _round_up(B, 8))               # batch tile (sublane multiple)
    B_pad = _round_up(B, Bt)
    xp = jnp.zeros((B_pad, T), jnp.float32).at[:B].set(x.astype(jnp.float32))

    args = (kp["c1"], kp["cb1"], kp["c2"], kp["cb2"], kp["c3"], kp["cb3"],
            kp["c4"], kp["cb4"], kp["fw"], kp["fb"])

    def full_spec(a):
        return pl.BlockSpec(a.shape, lambda b, _n=a.ndim: (0,) * _n)

    out = pl.pallas_call(
        functools.partial(_mmnn4_kernel, T=T),
        out_shape=jax.ShapeDtypeStruct((B_pad, T), jnp.float32),
        grid=(B_pad // Bt,),
        in_specs=[pl.BlockSpec((Bt, T), lambda b: (b, 0))]
                 + [full_spec(a) for a in args],
        out_specs=pl.BlockSpec((Bt, T), lambda b: (b, 0)),
        compiler_params=pltpu.CompilerParams(
            dimension_semantics=("parallel",)),
    )(xp, *args)
    # torch: output.squeeze() of (B, 1, T) -> (B, T) for B > 1
    return out[:B]


# --------------------- host-side parameter preparation ---------------------
def _conv_to_op(w, T):
    """Dense linear operator of a 'same'-padded Conv1d (PyTorch cross-corr).

    w: (Cout, Cin, K)  ->  (Cin*T, Cout*T) such that
    y_flat = x_flat @ op  reproduces  y[co, t] = sum_{ci,tau} w[co,ci,tau] *
    x[ci, t + tau - p]  with zero padding, and flat index = c*T + t
    (channel-major, matching torch .view(B, -1))."""
    Cout, Cin, K = w.shape
    p = (K - 1) // 2
    s = jnp.arange(T)[:, None]
    t = jnp.arange(T)[None, :]
    d = s - t + p                                   # tap index
    valid = (d >= 0) & (d < K)
    dc = jnp.clip(d, 0, K - 1)
    bands = jnp.where(valid[None, None], w[:, :, dc], 0.0)   # (Cout,Cin,T,T)
    return jnp.transpose(bands, (1, 2, 0, 3)).reshape(Cin * T, Cout * T)


def init_params(key, C, K, T):
    """Deterministic PyTorch-default-style init.
    Returns (torch-layout params for the reference, kernel-layout params)."""
    ks = jax.random.split(key, 12)

    def u(k, shape, fan_in):
        bound = 1.0 / math.sqrt(fan_in)
        return jax.random.uniform(k, shape, jnp.float32, -bound, bound)

    tp = {
        "w1": u(ks[0], (NUM_BLOCKS, C, 1, K), 1 * K),
        "b1": u(ks[1], (NUM_BLOCKS, C), 1 * K),
        "w2": u(ks[2], (NUM_BLOCKS, C, C, K), C * K),
        "b2": u(ks[3], (NUM_BLOCKS, C), C * K),
        "w3": u(ks[4], (NUM_BLOCKS, C, C, K), C * K),
        "b3": u(ks[5], (NUM_BLOCKS, C), C * K),
        "w4": u(ks[6], (NUM_BLOCKS, C, C, K), C * K),
        "b4": u(ks[7], (NUM_BLOCKS, C), C * K),
        "f1w": u(ks[8], (NUM_BLOCKS, T, C * T), C * T),
        "f1b": u(ks[9], (NUM_BLOCKS, T), C * T),
        "f2w": u(ks[10], (NUM_BLOCKS, T, C * T), C * T),
        "f2b": u(ks[11], (NUM_BLOCKS, T), C * T),
    }

    conv_op = jax.vmap(lambda w: _conv_to_op(w, T))      # over the block axis

    def bias_flat(b):                                    # (NB, C) -> (NB, 1, C*T)
        return jnp.repeat(b, T, axis=-1)[:, None, :]

    kp = {
        "c1": conv_op(tp["w1"]),                         # (NB, 1*T, C*T)
        "c2": conv_op(tp["w2"]),                         # (NB, C*T, C*T)
        "c3": conv_op(tp["w3"]),
        "c4": conv_op(tp["w4"]),
        "cb1": bias_flat(tp["b1"]),
        "cb2": bias_flat(tp["b2"]),
        "cb3": bias_flat(tp["b3"]),
        "cb4": bias_flat(tp["b4"]),
        # fused FC heads: signal in cols [0,T), noise in cols [T,2T)
        "fw": jnp.concatenate([jnp.transpose(tp["f1w"], (0, 2, 1)),
                               jnp.transpose(tp["f2w"], (0, 2, 1))], axis=-1),
        "fb": jnp.concatenate([tp["f1b"], tp["f2b"]], axis=-1)[:, None, :],
    }
    return tp, kp


# ---------------- pure-JAX reference (for validation only) ----------------
def _conv1d_ref(u, w, b, pad):
    y = jax.lax.conv_general_dilated(u, w, window_strides=(1,),
                                     padding=[(pad, pad)],
                                     dimension_numbers=("NCH", "OIH", "NCH"))
    return y + b[None, :, None]


def mmnn4_ref(x, tp, *, C, K, T):
    B = x.shape[0]
    p = (K - 1) // 2
    x3 = x[:, None, :]
    acc = jnp.zeros((B, 1, T), jnp.float32)
    noise = jnp.zeros((B, 1, T), jnp.float32)
    for blk in range(NUM_BLOCKS):
        u = x3 - noise
        h = jax.nn.relu(_conv1d_ref(u, tp["w1"][blk], tp["b1"][blk], p))
        h = jax.nn.relu(_conv1d_ref(h, tp["w2"][blk], tp["b2"][blk], p) + h)
        h = jax.nn.relu(_conv1d_ref(h, tp["w3"][blk], tp["b3"][blk], p) + h)
        h = jax.nn.relu(_conv1d_ref(h, tp["w4"][blk], tp["b4"][blk], p) + h)
        flat = h.reshape(B, -1)
        signal = flat @ tp["f1w"][blk].T + tp["f1b"][blk]
        noise = (flat @ tp["f2w"][blk].T + tp["f2b"][blk])[:, None, :]
        acc = acc + signal[:, None, :]
    return acc.reshape(B, T)


if __name__ == "__main__":
    B, C, K, T = 2, 4, 3, 16
    key = jax.random.PRNGKey(0)
    kx, kparams = jax.random.split(key)
    x = jax.random.normal(kx, (B, T), jnp.float32)
    tp, kp = init_params(kparams, C, K, T)

    out = mmnn4_forward(x, kp, C=C, K=K, T=T)
    out = jax.block_until_ready(out)

    ref = mmnn4_ref(x, tp, C=C, K=K, T=T)
    assert out.shape == (B, T)
    if not jnp.allclose(out, ref, rtol=1e-4, atol=1e-4):
        raise AssertionError(
            f"mismatch: max abs err {float(jnp.max(jnp.abs(out - ref)))}")
    print("KERNEL_OK")
</pallas_src>

<mosaic_0001>
module attributes {stable_mosaic.version = 11 : i64} {
  func.func @_mmnn4_kernel(%arg0: i32, %arg1: memref<8x16xf32, #tpu.memory_space<vmem>>, %arg2: memref<4x16x64xf32, #tpu.memory_space<vmem>>, %arg3: memref<4x1x64xf32, #tpu.memory_space<vmem>>, %arg4: memref<4x64x64xf32, #tpu.memory_space<vmem>>, %arg5: memref<4x1x64xf32, #tpu.memory_space<vmem>>, %arg6: memref<4x64x64xf32, #tpu.memory_space<vmem>>, %arg7: memref<4x1x64xf32, #tpu.memory_space<vmem>>, %arg8: memref<4x64x64xf32, #tpu.memory_space<vmem>>, %arg9: memref<4x1x64xf32, #tpu.memory_space<vmem>>, %arg10: memref<4x64x32xf32, #tpu.memory_space<vmem>>, %arg11: memref<4x1x32xf32, #tpu.memory_space<vmem>>, %arg12: memref<8x16xf32, #tpu.memory_space<vmem>>) attributes {dimension_semantics = [#tpu.dimension_semantics<parallel>], iteration_bounds = array<i64: 1>, scalar_prefetch = 0 : i64, scratch_operands = 0 : i64, tpu.core_type = #tpu.core_type<tc>, window_params = [{transform_indices = @transform_0, window_bounds = array<i64: 8, 16>}, {pipeline_mode = #tpu.pipeline_mode<synchronous>, transform_indices = @transform_1, window_bounds = array<i64: 4, 16, 64>}, {pipeline_mode = #tpu.pipeline_mode<synchronous>, transform_indices = @transform_2, window_bounds = array<i64: 4, 1, 64>}, {pipeline_mode = #tpu.pipeline_mode<synchronous>, transform_indices = @transform_3, window_bounds = array<i64: 4, 64, 64>}, {pipeline_mode = #tpu.pipeline_mode<synchronous>, transform_indices = @transform_4, window_bounds = array<i64: 4, 1, 64>}, {pipeline_mode = #tpu.pipeline_mode<synchronous>, transform_indices = @transform_5, window_bounds = array<i64: 4, 64, 64>}, {pipeline_mode = #tpu.pipeline_mode<synchronous>, transform_indices = @transform_6, window_bounds = array<i64: 4, 1, 64>}, {pipeline_mode = #tpu.pipeline_mode<synchronous>, transform_indices = @transform_7, window_bounds = array<i64: 4, 64, 64>}, {pipeline_mode = #tpu.pipeline_mode<synchronous>, transform_indices = @transform_8, window_bounds = array<i64: 4, 1, 64>}, {pipeline_mode = #tpu.pipeline_mode<synchronous>, transform_indices = @transform_9, window_bounds = array<i64: 4, 64, 32>}, {pipeline_mode = #tpu.pipeline_mode<synchronous>, transform_indices = @transform_10, window_bounds = array<i64: 4, 1, 32>}, {transform_indices = @transform_11, window_bounds = array<i64: 8, 16>}]} {
    %c0 = arith.constant 0 : index
    %c0_0 = arith.constant 0 : index
    %0 = vector.load %arg1[%c0, %c0_0] : memref<8x16xf32, #tpu.memory_space<vmem>>, vector<8x16xf32>
    %cst = arith.constant 0.000000e+00 : f32
    %1 = vector.broadcast %cst : f32 to vector<8x16xf32>
    %cst_1 = arith.constant 0.000000e+00 : f32
    %2 = vector.broadcast %cst_1 : f32 to vector<8x16xf32>
    %3 = arith.subf %0, %2 : vector<8x16xf32>
    %c0_2 = arith.constant 0 : index
    %c0_3 = arith.constant 0 : index
    %c0_4 = arith.constant 0 : index
    %4 = vector.load %arg2[%c0_2, %c0_3, %c0_4] : memref<4x16x64xf32, #tpu.memory_space<vmem>>, vector<1x16x64xf32>
    %5 = vector.shape_cast %4 : vector<1x16x64xf32> to vector<16x64xf32>
    %cst_5 = arith.constant dense<0.000000e+00> : vector<8x64xf32>
    %6 = tpu.matmul %3, %5, %cst_5 {dimension_numbers = #tpu.dot_dimension_numbers<[1], [0], [0], [1], [0, 0, 1, 1], [], []>} : vector<8x16xf32>, vector<16x64xf32>, vector<8x64xf32> -> vector<8x64xf32>
    %c0_6 = arith.constant 0 : index
    %c0_7 = arith.constant 0 : index
    %c0_8 = arith.constant 0 : index
    %7 = vector.load %arg3[%c0_6, %c0_7, %c0_8] : memref<4x1x64xf32, #tpu.memory_space<vmem>>, vector<1x1x64xf32>
    %8 = vector.shape_cast %7 : vector<1x1x64xf32> to vector<1x64xf32>
    %9 = vector.broadcast %8 : vector<1x64xf32> to vector<8x64xf32>
    %10 = arith.addf %6, %9 : vector<8x64xf32>
    %cst_9 = arith.constant 0.000000e+00 : f32
    %11 = vector.broadcast %cst_9 : f32 to vector<8x64xf32>
    %12 = arith.maximumf %10, %11 : vector<8x64xf32>
    %c0_10 = arith.constant 0 : index
    %c0_11 = arith.constant 0 : index
    %c0_12 = arith.constant 0 : index
    %13 = vector.load %arg4[%c0_10, %c0_11, %c0_12] : memref<4x64x64xf32, #tpu.memory_space<vmem>>, vector<1x64x64xf32>
    %14 = vector.shape_cast %13 : vector<1x64x64xf32> to vector<64x64xf32>
    %cst_13 = arith.constant dense<0.000000e+00> : vector<8x64xf32>
    %15 = tpu.matmul %12, %14, %cst_13 {dimension_numbers = #tpu.dot_dimension_numbers<[1], [0], [0], [1], [0, 0, 1, 1], [], []>} : vector<8x64xf32>, vector<64x64xf32>, vector<8x64xf32> -> vector<8x64xf32>
    %c0_14 = arith.constant 0 : index
    %c0_15 = arith.constant 0 : index
    %c0_16 = arith.constant 0 : index
    %16 = vector.load %arg5[%c0_14, %c0_15, %c0_16] : memref<4x1x64xf32, #tpu.memory_space<vmem>>, vector<1x1x64xf32>
    %17 = vector.shape_cast %16 : vector<1x1x64xf32> to vector<1x64xf32>
    %18 = vector.broadcast %17 : vector<1x64xf32> to vector<8x64xf32>
    %19 = arith.addf %15, %18 : vector<8x64xf32>
    %20 = arith.addf %19, %12 : vector<8x64xf32>
    %cst_17 = arith.constant 0.000000e+00 : f32
    %21 = vector.broadcast %cst_17 : f32 to vector<8x64xf32>
    %22 = arith.maximumf %20, %21 : vector<8x64xf32>
    %c0_18 = arith.constant 0 : index
    %c0_19 = arith.constant 0 : index
    %c0_20 = arith.constant 0 : index
    %23 = vector.load %arg6[%c0_18, %c0_19, %c0_20] : memref<4x64x64xf32, #tpu.memory_space<vmem>>, vector<1x64x64xf32>
    %24 = vector.shape_cast %23 : vector<1x64x64xf32> to vector<64x64xf32>
    %cst_21 = arith.constant dense<0.000000e+00> : vector<8x64xf32>
    %25 = tpu.matmul %22, %24, %cst_21 {dimension_numbers = #tpu.dot_dimension_numbers<[1], [0], [0], [1], [0, 0, 1, 1], [], []>} : vector<8x64xf32>, vector<64x64xf32>, vector<8x64xf32> -> vector<8x64xf32>
    %c0_22 = arith.constant 0 : index
    %c0_23 = arith.constant 0 : index
    %c0_24 = arith.constant 0 : index
    %26 = vector.load %arg7[%c0_22, %c0_23, %c0_24] : memref<4x1x64xf32, #tpu.memory_space<vmem>>, vector<1x1x64xf32>
    %27 = vector.shape_cast %26 : vector<1x1x64xf32> to vector<1x64xf32>
    %28 = vector.broadcast %27 : vector<1x64xf32> to vector<8x64xf32>
    %29 = arith.addf %25, %28 : vector<8x64xf32>
    %30 = arith.addf %29, %22 : vector<8x64xf32>
    %cst_25 = arith.constant 0.000000e+00 : f32
    %31 = vector.broadcast %cst_25 : f32 to vector<8x64xf32>
    %32 = arith.maximumf %30, %31 : vector<8x64xf32>
    %c0_26 = arith.constant 0 : index
    %c0_27 = arith.constant 0 : index
    %c0_28 = arith.constant 0 : index
    %33 = vector.load %arg8[%c0_26, %c0_27, %c0_28] : memref<4x64x64xf32, #tpu.memory_space<vmem>>, vector<1x64x64xf32>
    %34 = vector.shape_cast %33 : vector<1x64x64xf32> to vector<64x64xf32>
    %cst_29 = arith.constant dense<0.000000e+00> : vector<8x64xf32>
    %35 = tpu.matmul %32, %34, %cst_29 {dimension_numbers = #tpu.dot_dimension_numbers<[1], [0], [0], [1], [0, 0, 1, 1], [], []>} : vector<8x64xf32>, vector<64x64xf32>, vector<8x64xf32> -> vector<8x64xf32>
    %c0_30 = arith.constant 0 : index
    %c0_31 = arith.constant 0 : index
    %c0_32 = arith.constant 0 : index
    %36 = vector.load %arg9[%c0_30, %c0_31, %c0_32] : memref<4x1x64xf32, #tpu.memory_space<vmem>>, vector<1x1x64xf32>
    %37 = vector.shape_cast %36 : vector<1x1x64xf32> to vector<1x64xf32>
    %38 = vector.broadcast %37 : vector<1x64xf32> to vector<8x64xf32>
    %39 = arith.addf %35, %38 : vector<8x64xf32>
    %40 = arith.addf %39, %32 : vector<8x64xf32>
    %cst_33 = arith.constant 0.000000e+00 : f32
    %41 = vector.broadcast %cst_33 : f32 to vector<8x64xf32>
    %42 = arith.maximumf %40, %41 : vector<8x64xf32>
    %c0_34 = arith.constant 0 : index
    %c0_35 = arith.constant 0 : index
    %c0_36 = arith.constant 0 : index
    %43 = vector.load %arg10[%c0_34, %c0_35, %c0_36] : memref<4x64x32xf32, #tpu.memory_space<vmem>>, vector<1x64x32xf32>
    %44 = vector.shape_cast %43 : vector<1x64x32xf32> to vector<64x32xf32>
    %cst_37 = arith.constant dense<0.000000e+00> : vector<8x32xf32>
    %45 = tpu.matmul %42, %44, %cst_37 {dimension_numbers = #tpu.dot_dimension_numbers<[1], [0], [0], [1], [0, 0, 1, 1], [], []>} : vector<8x64xf32>, vector<64x32xf32>, vector<8x32xf32> -> vector<8x32xf32>
    %c0_38 = arith.constant 0 : index
    %c0_39 = arith.constant 0 : index
    %c0_40 = arith.constant 0 : index
    %46 = vector.load %arg11[%c0_38, %c0_39, %c0_40] : memref<4x1x32xf32, #tpu.memory_space<vmem>>, vector<1x1x32xf32>
    %47 = vector.shape_cast %46 : vector<1x1x32xf32> to vector<1x32xf32>
    %48 = vector.broadcast %47 : vector<1x32xf32> to vector<8x32xf32>
    %49 = arith.addf %45, %48 : vector<8x32xf32>
    %50 = vector.extract_strided_slice %49 {offsets = [0, 0], sizes = [8, 16], strides = [1, 1]} : vector<8x32xf32> to vector<8x16xf32>
    %51 = arith.addf %1, %50 : vector<8x16xf32>
    %52 = vector.extract_strided_slice %49 {offsets = [0, 16], sizes = [8, 16], strides = [1, 1]} : vector<8x32xf32> to vector<8x16xf32>
    %53 = arith.subf %0, %52 : vector<8x16xf32>
    %c1 = arith.constant 1 : index
    %c0_41 = arith.constant 0 : index
    %c0_42 = arith.constant 0 : index
    %54 = vector.load %arg2[%c1, %c0_41, %c0_42] : memref<4x16x64xf32, #tpu.memory_space<vmem>>, vector<1x16x64xf32>
    %55 = vector.shape_cast %54 : vector<1x16x64xf32> to vector<16x64xf32>
    %cst_43 = arith.constant dense<0.000000e+00> : vector<8x64xf32>
    %56 = tpu.matmul %53, %55, %cst_43 {dimension_numbers = #tpu.dot_dimension_numbers<[1], [0], [0], [1], [0, 0, 1, 1], [], []>} : vector<8x16xf32>, vector<16x64xf32>, vector<8x64xf32> -> vector<8x64xf32>
    %c1_44 = arith.constant 1 : index
    %c0_45 = arith.constant 0 : index
    %c0_46 = arith.constant 0 : index
    %57 = vector.load %arg3[%c1_44, %c0_45, %c0_46] : memref<4x1x64xf32, #tpu.memory_space<vmem>>, vector<1x1x64xf32>
    %58 = vector.shape_cast %57 : vector<1x1x64xf32> to vector<1x64xf32>
    %59 = vector.broadcast %58 : vector<1x64xf32> to vector<8x64xf32>
    %60 = arith.addf %56, %59 : vector<8x64xf32>
    %cst_47 = arith.constant 0.000000e+00 : f32
    %61 = vector.broadcast %cst_47 : f32 to vector<8x64xf32>
    %62 = arith.maximumf %60, %61 : vector<8x64xf32>
    %c1_48 = arith.constant 1 : index
    %c0_49 = arith.constant 0 : index
    %c0_50 = arith.constant 0 : index
    %63 = vector.load %arg4[%c1_48, %c0_49, %c0_50] : memref<4x64x64xf32, #tpu.memory_space<vmem>>, vector<1x64x64xf32>
    %64 = vector.shape_cast %63 : vector<1x64x64xf32> to vector<64x64xf32>
    %cst_51 = arith.constant dense<0.000000e+00> : vector<8x64xf32>
    %65 = tpu.matmul %62, %64, %cst_51 {dimension_numbers = #tpu.dot_dimension_numbers<[1], [0], [0], [1], [0, 0, 1, 1], [], []>} : vector<8x64xf32>, vector<64x64xf32>, vector<8x64xf32> -> vector<8x64xf32>
    %c1_52 = arith.constant 1 : index
    %c0_53 = arith.constant 0 : index
    %c0_54 = arith.constant 0 : index
    %66 = vector.load %arg5[%c1_52, %c0_53, %c0_54] : memref<4x1x64xf32, #tpu.memory_space<vmem>>, vector<1x1x64xf32>
    %67 = vector.shape_cast %66 : vector<1x1x64xf32> to vector<1x64xf32>
    %68 = vector.broadcast %67 : vector<1x64xf32> to vector<8x64xf32>
    %69 = arith.addf %65, %68 : vector<8x64xf32>
    %70 = arith.addf %69, %62 : vector<8x64xf32>
    %cst_55 = arith.constant 0.000000e+00 : f32
    %71 = vector.broadcast %cst_55 : f32 to vector<8x64xf32>
    %72 = arith.maximumf %70, %71 : vector<8x64xf32>
    %c1_56 = arith.constant 1 : index
    %c0_57 = arith.constant 0 : index
    %c0_58 = arith.constant 0 : index
    %73 = vector.load %arg6[%c1_56, %c0_57, %c0_58] : memref<4x64x64xf32, #tpu.memory_space<vmem>>, vector<1x64x64xf32>
    %74 = vector.shape_cast %73 : vector<1x64x64xf32> to vector<64x64xf32>
    %cst_59 = arith.constant dense<0.000000e+00> : vector<8x64xf32>
    %75 = tpu.matmul %72, %74, %cst_59 {dimension_numbers = #tpu.dot_dimension_numbers<[1], [0], [0], [1], [0, 0, 1, 1], [], []>} : vector<8x64xf32>, vector<64x64xf32>, vector<8x64xf32> -> vector<8x64xf32>
    %c1_60 = arith.constant 1 : index
    %c0_61 = arith.constant 0 : index
    %c0_62 = arith.constant 0 : index
    %76 = vector.load %arg7[%c1_60, %c0_61, %c0_62] : memref<4x1x64xf32, #tpu.memory_space<vmem>>, vector<1x1x64xf32>
    %77 = vector.shape_cast %76 : vector<1x1x64xf32> to vector<1x64xf32>
    %78 = vector.broadcast %77 : vector<1x64xf32> to vector<8x64xf32>
    %79 = arith.addf %75, %78 : vector<8x64xf32>
    %80 = arith.addf %79, %72 : vector<8x64xf32>
    %cst_63 = arith.constant 0.000000e+00 : f32
    %81 = vector.broadcast %cst_63 : f32 to vector<8x64xf32>
    %82 = arith.maximumf %80, %81 : vector<8x64xf32>
    %c1_64 = arith.constant 1 : index
    %c0_65 = arith.constant 0 : index
    %c0_66 = arith.constant 0 : index
    %83 = vector.load %arg8[%c1_64, %c0_65, %c0_66] : memref<4x64x64xf32, #tpu.memory_space<vmem>>, vector<1x64x64xf32>
    %84 = vector.shape_cast %83 : vector<1x64x64xf32> to vector<64x64xf32>
    %cst_67 = arith.constant dense<0.000000e+00> : vector<8x64xf32>
    %85 = tpu.matmul %82, %84, %cst_67 {dimension_numbers = #tpu.dot_dimension_numbers<[1], [0], [0], [1], [0, 0, 1, 1], [], []>} : vector<8x64xf32>, vector<64x64xf32>, vector<8x64xf32> -> vector<8x64xf32>
    %c1_68 = arith.constant 1 : index
    %c0_69 = arith.constant 0 : index
    %c0_70 = arith.constant 0 : index
    %86 = vector.load %arg9[%c1_68, %c0_69, %c0_70] : memref<4x1x64xf32, #tpu.memory_space<vmem>>, vector<1x1x64xf32>
    %87 = vector.shape_cast %86 : vector<1x1x64xf32> to vector<1x64xf32>
    %88 = vector.broadcast %87 : vector<1x64xf32> to vector<8x64xf32>
    %89 = arith.addf %85, %88 : vector<8x64xf32>
    %90 = arith.addf %89, %82 : vector<8x64xf32>
    %cst_71 = arith.constant 0.000000e+00 : f32
    %91 = vector.broadcast %cst_71 : f32 to vector<8x64xf32>
    %92 = arith.maximumf %90, %91 : vector<8x64xf32>
    %c1_72 = arith.constant 1 : index
    %c0_73 = arith.constant 0 : index
    %c0_74 = arith.constant 0 : index
    %93 = vector.load %arg10[%c1_72, %c0_73, %c0_74] : memref<4x64x32xf32, #tpu.memory_space<vmem>>, vector<1x64x32xf32>
    %94 = vector.shape_cast %93 : vector<1x64x32xf32> to vector<64x32xf32>
    %cst_75 = arith.constant dense<0.000000e+00> : vector<8x32xf32>
    %95 = tpu.matmul %92, %94, %cst_75 {dimension_numbers = #tpu.dot_dimension_numbers<[1], [0], [0], [1], [0, 0, 1, 1], [], []>} : vector<8x64xf32>, vector<64x32xf32>, vector<8x32xf32> -> vector<8x32xf32>
    %c1_76 = arith.constant 1 : index
    %c0_77 = arith.constant 0 : index
    %c0_78 = arith.constant 0 : index
    %96 = vector.load %arg11[%c1_76, %c0_77, %c0_78] : memref<4x1x32xf32, #tpu.memory_space<vmem>>, vector<1x1x32xf32>
    %97 = vector.shape_cast %96 : vector<1x1x32xf32> to vector<1x32xf32>
    %98 = vector.broadcast %97 : vector<1x32xf32> to vector<8x32xf32>
    %99 = arith.addf %95, %98 : vector<8x32xf32>
    %100 = vector.extract_strided_slice %99 {offsets = [0, 0], sizes = [8, 16], strides = [1, 1]} : vector<8x32xf32> to vector<8x16xf32>
    %101 = arith.addf %51, %100 : vector<8x16xf32>
    %102 = vector.extract_strided_slice %99 {offsets = [0, 16], sizes = [8, 16], strides = [1, 1]} : vector<8x32xf32> to vector<8x16xf32>
    %103 = arith.subf %0, %102 : vector<8x16xf32>
    %c2 = arith.constant 2 : index
    %c0_79 = arith.constant 0 : index
    %c0_80 = arith.constant 0 : index
    %104 = vector.load %arg2[%c2, %c0_79, %c0_80] : memref<4x16x64xf32, #tpu.memory_space<vmem>>, vector<1x16x64xf32>
    %105 = vector.shape_cast %104 : vector<1x16x64xf32> to vector<16x64xf32>
    %cst_81 = arith.constant dense<0.000000e+00> : vector<8x64xf32>
    %106 = tpu.matmul %103, %105, %cst_81 {dimension_numbers = #tpu.dot_dimension_numbers<[1], [0], [0], [1], [0, 0, 1, 1], [], []>} : vector<8x16xf32>, vector<16x64xf32>, vector<8x64xf32> -> vector<8x64xf32>
    %c2_82 = arith.constant 2 : index
    %c0_83 = arith.constant 0 : index
    %c0_84 = arith.constant 0 : index
    %107 = vector.load %arg3[%c2_82, %c0_83, %c0_84] : memref<4x1x64xf32, #tpu.memory_space<vmem>>, vector<1x1x64xf32>
    %108 = vector.shape_cast %107 : vector<1x1x64xf32> to vector<1x64xf32>
    %109 = vector.broadcast %108 : vector<1x64xf32> to vector<8x64xf32>
    %110 = arith.addf %106, %109 : vector<8x64xf32>
    %cst_85 = arith.constant 0.000000e+00 : f32
    %111 = vector.broadcast %cst_85 : f32 to vector<8x64xf32>
    %112 = arith.maximumf %110, %111 : vector<8x64xf32>
    %c2_86 = arith.constant 2 : index
    %c0_87 = arith.constant 0 : index
    %c0_88 = arith.constant 0 : index
    %113 = vector.load %arg4[%c2_86, %c0_87, %c0_88] : memref<4x64x64xf32, #tpu.memory_space<vmem>>, vector<1x64x64xf32>
    %114 = vector.shape_cast %113 : vector<1x64x64xf32> to vector<64x64xf32>
    %cst_89 = arith.constant dense<0.000000e+00> : vector<8x64xf32>
    %115 = tpu.matmul %112, %114, %cst_89 {dimension_numbers = #tpu.dot_dimension_numbers<[1], [0], [0], [1], [0, 0, 1, 1], [], []>} : vector<8x64xf32>, vector<64x64xf32>, vector<8x64xf32> -> vector<8x64xf32>
    %c2_90 = arith.constant 2 : index
    %c0_91 = arith.constant 0 : index
    %c0_92 = arith.constant 0 : index
    %116 = vector.load %arg5[%c2_90, %c0_91, %c0_92] : memref<4x1x64xf32, #tpu.memory_space<vmem>>, vector<1x1x64xf32>
    %117 = vector.shape_cast %116 : vector<1x1x64xf32> to vector<1x64xf32>
    %118 = vector.broadcast %117 : vector<1x64xf32> to vector<8x64xf32>
    %119 = arith.addf %115, %118 : vector<8x64xf32>
    %120 = arith.addf %119, %112 : vector<8x64xf32>
    %cst_93 = arith.constant 0.000000e+00 : f32
    %121 = vector.broadcast %cst_93 : f32 to vector<8x64xf32>
    %122 = arith.maximumf %120, %121 : vector<8x64xf32>
    %c2_94 = arith.constant 2 : index
    %c0_95 = arith.constant 0 : index
    %c0_96 = arith.constant 0 : index
    %123 = vector.load %arg6[%c2_94, %c0_95, %c0_96] : memref<4x64x64xf32, #tpu.memory_space<vmem>>, vector<1x64x64xf32>
    %124 = vector.shape_cast %123 : vector<1x64x64xf32> to vector<64x64xf32>
    %cst_97 = arith.constant dense<0.000000e+00> : vector<8x64xf32>
    %125 = tpu.matmul %122, %124, %cst_97 {dimension_numbers = #tpu.dot_dimension_numbers<[1], [0], [0], [1], [0, 0, 1, 1], [], []>} : vector<8x64xf32>, vector<64x64xf32>, vector<8x64xf32> -> vector<8x64xf32>
    %c2_98 = arith.constant 2 : index
    %c0_99 = arith.constant 0 : index
    %c0_100 = arith.constant 0 : index
    %126 = vector.load %arg7[%c2_98, %c0_99, %c0_100] : memref<4x1x64xf32, #tpu.memory_space<vmem>>, vector<1x1x64xf32>
    %127 = vector.shape_cast %126 : vector<1x1x64xf32> to vector<1x64xf32>
    %128 = vector.broadcast %127 : vector<1x64xf32> to vector<8x64xf32>
    %129 = arith.addf %125, %128 : vector<8x64xf32>
    %130 = arith.addf %129, %122 : vector<8x64xf32>
    %cst_101 = arith.constant 0.000000e+00 : f32
    %131 = vector.broadcast %cst_101 : f32 to vector<8x64xf32>
    %132 = arith.maximumf %130, %131 : vector<8x64xf32>
    %c2_102 = arith.constant 2 : index
    %c0_103 = arith.constant 0 : index
    %c0_104 = arith.constant 0 : index
    %133 = vector.load %arg8[%c2_102, %c0_103, %c0_104] : memref<4x64x64xf32, #tpu.memory_space<vmem>>, vector<1x64x64xf32>
    %134 = vector.shape_cast %133 : vector<1x64x64xf32> to vector<64x64xf32>
    %cst_105 = arith.constant dense<0.000000e+00> : vector<8x64xf32>
    %135 = tpu.matmul %132, %134, %cst_105 {dimension_numbers = #tpu.dot_dimension_numbers<[1], [0], [0], [1], [0, 0, 1, 1], [], []>} : vector<8x64xf32>, vector<64x64xf32>, vector<8x64xf32> -> vector<8x64xf32>
    %c2_106 = arith.constant 2 : index
    %c0_107 = arith.constant 0 : index
    %c0_108 = arith.constant 0 : index
    %136 = vector.load %arg9[%c2_106, %c0_107, %c0_108] : memref<4x1x64xf32, #tpu.memory_space<vmem>>, vector<1x1x64xf32>
    %137 = vector.shape_cast %136 : vector<1x1x64xf32> to vector<1x64xf32>
    %138 = vector.broadcast %137 : vector<1x64xf32> to vector<8x64xf32>
    %139 = arith.addf %135, %138 : vector<8x64xf32>
    %140 = arith.addf %139, %132 : vector<8x64xf32>
    %cst_109 = arith.constant 0.000000e+00 : f32
    %141 = vector.broadcast %cst_109 : f32 to vector<8x64xf32>
    %142 = arith.maximumf %140, %141 : vector<8x64xf32>
    %c2_110 = arith.constant 2 : index
    %c0_111 = arith.constant 0 : index
    %c0_112 = arith.constant 0 : index
    %143 = vector.load %arg10[%c2_110, %c0_111, %c0_112] : memref<4x64x32xf32, #tpu.memory_space<vmem>>, vector<1x64x32xf32>
    %144 = vector.shape_cast %143 : vector<1x64x32xf32> to vector<64x32xf32>
    %cst_113 = arith.constant dense<0.000000e+00> : vector<8x32xf32>
    %145 = tpu.matmul %142, %144, %cst_113 {dimension_numbers = #tpu.dot_dimension_numbers<[1], [0], [0], [1], [0, 0, 1, 1], [], []>} : vector<8x64xf32>, vector<64x32xf32>, vector<8x32xf32> -> vector<8x32xf32>
    %c2_114 = arith.constant 2 : index
    %c0_115 = arith.constant 0 : index
    %c0_116 = arith.constant 0 : index
    %146 = vector.load %arg11[%c2_114, %c0_115, %c0_116] : memref<4x1x32xf32, #tpu.memory_space<vmem>>, vector<1x1x32xf32>
    %147 = vector.shape_cast %146 : vector<1x1x32xf32> to vector<1x32xf32>
    %148 = vector.broadcast %147 : vector<1x32xf32> to vector<8x32xf32>
    %149 = arith.addf %145, %148 : vector<8x32xf32>
    %150 = vector.extract_strided_slice %149 {offsets = [0, 0], sizes = [8, 16], strides = [1, 1]} : vector<8x32xf32> to vector<8x16xf32>
    %151 = arith.addf %101, %150 : vector<8x16xf32>
    %152 = vector.extract_strided_slice %149 {offsets = [0, 16], sizes = [8, 16], strides = [1, 1]} : vector<8x32xf32> to vector<8x16xf32>
    %153 = arith.subf %0, %152 : vector<8x16xf32>
    %c3 = arith.constant 3 : index
    %c0_117 = arith.constant 0 : index
    %c0_118 = arith.constant 0 : index
    %154 = vector.load %arg2[%c3, %c0_117, %c0_118] : memref<4x16x64xf32, #tpu.memory_space<vmem>>, vector<1x16x64xf32>
    %155 = vector.shape_cast %154 : vector<1x16x64xf32> to vector<16x64xf32>
    %cst_119 = arith.constant dense<0.000000e+00> : vector<8x64xf32>
    %156 = tpu.matmul %153, %155, %cst_119 {dimension_numbers = #tpu.dot_dimension_numbers<[1], [0], [0], [1], [0, 0, 1, 1], [], []>} : vector<8x16xf32>, vector<16x64xf32>, vector<8x64xf32> -> vector<8x64xf32>
    %c3_120 = arith.constant 3 : index
    %c0_121 = arith.constant 0 : index
    %c0_122 = arith.constant 0 : index
    %157 = vector.load %arg3[%c3_120, %c0_121, %c0_122] : memref<4x1x64xf32, #tpu.memory_space<vmem>>, vector<1x1x64xf32>
    %158 = vector.shape_cast %157 : vector<1x1x64xf32> to vector<1x64xf32>
    %159 = vector.broadcast %158 : vector<1x64xf32> to vector<8x64xf32>
    %160 = arith.addf %156, %159 : vector<8x64xf32>
    %cst_123 = arith.constant 0.000000e+00 : f32
    %161 = vector.broadcast %cst_123 : f32 to vector<8x64xf32>
    %162 = arith.maximumf %160, %161 : vector<8x64xf32>
    %c3_124 = arith.constant 3 : index
    %c0_125 = arith.constant 0 : index
    %c0_126 = arith.constant 0 : index
    %163 = vector.load %arg4[%c3_124, %c0_125, %c0_126] : memref<4x64x64xf32, #tpu.memory_space<vmem>>, vector<1x64x64xf32>
    %164 = vector.shape_cast %163 : vector<1x64x64xf32> to vector<64x64xf32>
    %cst_127 = arith.constant dense<0.000000e+00> : vector<8x64xf32>
    %165 = tpu.matmul %162, %164, %cst_127 {dimension_numbers = #tpu.dot_dimension_numbers<[1], [0], [0], [1], [0, 0, 1, 1], [], []>} : vector<8x64xf32>, vector<64x64xf32>, vector<8x64xf32> -> vector<8x64xf32>
    %c3_128 = arith.constant 3 : index
    %c0_129 = arith.constant 0 : index
    %c0_130 = arith.constant 0 : index
    %166 = vector.load %arg5[%c3_128, %c0_129, %c0_130] : memref<4x1x64xf32, #tpu.memory_space<vmem>>, vector<1x1x64xf32>
    %167 = vector.shape_cast %166 : vector<1x1x64xf32> to vector<1x64xf32>
    %168 = vector.broadcast %167 : vector<1x64xf32> to vector<8x64xf32>
    %169 = arith.addf %165, %168 : vector<8x64xf32>
    %170 = arith.addf %169, %162 : vector<8x64xf32>
    %cst_131 = arith.constant 0.000000e+00 : f32
    %171 = vector.broadcast %cst_131 : f32 to vector<8x64xf32>
    %172 = arith.maximumf %170, %171 : vector<8x64xf32>
    %c3_132 = arith.constant 3 : index
    %c0_133 = arith.constant 0 : index
    %c0_134 = arith.constant 0 : index
    %173 = vector.load %arg6[%c3_132, %c0_133, %c0_134] : memref<4x64x64xf32, #tpu.memory_space<vmem>>, vector<1x64x64xf32>
    %174 = vector.shape_cast %173 : vector<1x64x64xf32> to vector<64x64xf32>
    %cst_135 = arith.constant dense<0.000000e+00> : vector<8x64xf32>
    %175 = tpu.matmul %172, %174, %cst_135 {dimension_numbers = #tpu.dot_dimension_numbers<[1], [0], [0], [1], [0, 0, 1, 1], [], []>} : vector<8x64xf32>, vector<64x64xf32>, vector<8x64xf32> -> vector<8x64xf32>
    %c3_136 = arith.constant 3 : index
    %c0_137 = arith.constant 0 : index
    %c0_138 = arith.constant 0 : index
    %176 = vector.load %arg7[%c3_136, %c0_137, %c0_138] : memref<4x1x64xf32, #tpu.memory_space<vmem>>, vector<1x1x64xf32>
    %177 = vector.shape_cast %176 : vector<1x1x64xf32> to vector<1x64xf32>
    %178 = vector.broadcast %177 : vector<1x64xf32> to vector<8x64xf32>
    %179 = arith.addf %175, %178 : vector<8x64xf32>
    %180 = arith.addf %179, %172 : vector<8x64xf32>
    %cst_139 = arith.constant 0.000000e+00 : f32
    %181 = vector.broadcast %cst_139 : f32 to vector<8x64xf32>
    %182 = arith.maximumf %180, %181 : vector<8x64xf32>
    %c3_140 = arith.constant 3 : index
    %c0_141 = arith.constant 0 : index
    %c0_142 = arith.constant 0 : index
    %183 = vector.load %arg8[%c3_140, %c0_141, %c0_142] : memref<4x64x64xf32, #tpu.memory_space<vmem>>, vector<1x64x64xf32>
    %184 = vector.shape_cast %183 : vector<1x64x64xf32> to vector<64x64xf32>
    %cst_143 = arith.constant dense<0.000000e+00> : vector<8x64xf32>
    %185 = tpu.matmul %182, %184, %cst_143 {dimension_numbers = #tpu.dot_dimension_numbers<[1], [0], [0], [1], [0, 0, 1, 1], [], []>} : vector<8x64xf32>, vector<64x64xf32>, vector<8x64xf32> -> vector<8x64xf32>
    %c3_144 = arith.constant 3 : index
    %c0_145 = arith.constant 0 : index
    %c0_146 = arith.constant 0 : index
    %186 = vector.load %arg9[%c3_144, %c0_145, %c0_146] : memref<4x1x64xf32, #tpu.memory_space<vmem>>, vector<1x1x64xf32>
    %187 = vector.shape_cast %186 : vector<1x1x64xf32> to vector<1x64xf32>
    %188 = vector.broadcast %187 : vector<1x64xf32> to vector<8x64xf32>
    %189 = arith.addf %185, %188 : vector<8x64xf32>
    %190 = arith.addf %189, %182 : vector<8x64xf32>
    %cst_147 = arith.constant 0.000000e+00 : f32
    %191 = vector.broadcast %cst_147 : f32 to vector<8x64xf32>
    %192 = arith.maximumf %190, %191 : vector<8x64xf32>
    %c3_148 = arith.constant 3 : index
    %c0_149 = arith.constant 0 : index
    %c0_150 = arith.constant 0 : index
    %193 = vector.load %arg10[%c3_148, %c0_149, %c0_150] : memref<4x64x32xf32, #tpu.memory_space<vmem>>, vector<1x64x32xf32>
    %194 = vector.shape_cast %193 : vector<1x64x32xf32> to vector<64x32xf32>
    %cst_151 = arith.constant dense<0.000000e+00> : vector<8x32xf32>
    %195 = tpu.matmul %192, %194, %cst_151 {dimension_numbers = #tpu.dot_dimension_numbers<[1], [0], [0], [1], [0, 0, 1, 1], [], []>} : vector<8x64xf32>, vector<64x32xf32>, vector<8x32xf32> -> vector<8x32xf32>
    %c3_152 = arith.constant 3 : index
    %c0_153 = arith.constant 0 : index
    %c0_154 = arith.constant 0 : index
    %196 = vector.load %arg11[%c3_152, %c0_153, %c0_154] : memref<4x1x32xf32, #tpu.memory_space<vmem>>, vector<1x1x32xf32>
    %197 = vector.shape_cast %196 : vector<1x1x32xf32> to vector<1x32xf32>
    %198 = vector.broadcast %197 : vector<1x32xf32> to vector<8x32xf32>
    %199 = arith.addf %195, %198 : vector<8x32xf32>
    %200 = vector.extract_strided_slice %199 {offsets = [0, 0], sizes = [8, 16], strides = [1, 1]} : vector<8x32xf32> to vector<8x16xf32>
    %201 = arith.addf %151, %200 : vector<8x16xf32>
    %c0_155 = arith.constant 0 : index
    %c0_156 = arith.constant 0 : index
    %202 = vector.load %arg12[%c0_155, %c0_156] : memref<8x16xf32, #tpu.memory_space<vmem>>, vector<8x16xf32>
    tpu.vector_store %arg12[%c0_155, %c0_156], %201 {strides = array<i32>} : memref<8x16xf32, #tpu.memory_space<vmem>>, vector<8x16xf32>,
    return
  }
  func.func @transform_0(%arg0: i32) -> (i32, i32) {
    %c0_i32 = arith.constant 0 : i32
    %c0_i32_0 = arith.constant 0 : i32
    return %arg0, %c0_i32 : i32, i32
  }
  func.func @transform_1(%arg0: i32) -> (i32, i32, i32) {
    %c0_i32 = arith.constant 0 : i32
    %c0_i32_0 = arith.constant 0 : i32
    %c0_i32_1 = arith.constant 0 : i32
    %c0_i32_2 = arith.constant 0 : i32
    return %c0_i32, %c0_i32_0, %c0_i32_1 : i32, i32, i32
  }
  func.func @transform_2(%arg0: i32) -> (i32, i32, i32) {
    %c0_i32 = arith.constant 0 : i32
    %c0_i32_0 = arith.constant 0 : i32
    %c0_i32_1 = arith.constant 0 : i32
    %c0_i32_2 = arith.constant 0 : i32
    return %c0_i32, %c0_i32_0, %c0_i32_1 : i32, i32, i32
  }
  func.func @transform_3(%arg0: i32) -> (i32, i32, i32) {
    %c0_i32 = arith.constant 0 : i32
    %c0_i32_0 = arith.constant 0 : i32
    %c0_i32_1 = arith.constant 0 : i32
    %c0_i32_2 = arith.constant 0 : i32
    return %c0_i32, %c0_i32_0, %c0_i32_1 : i32, i32, i32
  }
  func.func @transform_4(%arg0: i32) -> (i32, i32, i32) {
    %c0_i32 = arith.constant 0 : i32
    %c0_i32_0 = arith.constant 0 : i32
    %c0_i32_1 = arith.constant 0 : i32
    %c0_i32_2 = arith.constant 0 : i32
    return %c0_i32, %c0_i32_0, %c0_i32_1 : i32, i32, i32
  }
  func.func @transform_5(%arg0: i32) -> (i32, i32, i32) {
    %c0_i32 = arith.constant 0 : i32
    %c0_i32_0 = arith.constant 0 : i32
    %c0_i32_1 = arith.constant 0 : i32
    %c0_i32_2 = arith.constant 0 : i32
    return %c0_i32, %c0_i32_0, %c0_i32_1 : i32, i32, i32
  }
  func.func @transform_6(%arg0: i32) -> (i32, i32, i32) {
    %c0_i32 = arith.constant 0 : i32
    %c0_i32_0 = arith.constant 0 : i32
    %c0_i32_1 = arith.constant 0 : i32
    %c0_i32_2 = arith.constant 0 : i32
    return %c0_i32, %c0_i32_0, %c0_i32_1 : i32, i32, i32
  }
  func.func @transform_7(%arg0: i32) -> (i32, i32, i32) {
    %c0_i32 = arith.constant 0 : i32
    %c0_i32_0 = arith.constant 0 : i32
    %c0_i32_1 = arith.constant 0 : i32
    %c0_i32_2 = arith.constant 0 : i32
    return %c0_i32, %c0_i32_0, %c0_i32_1 : i32, i32, i32
  }
  func.func @transform_8(%arg0: i32) -> (i32, i32, i32) {
    %c0_i32 = arith.constant 0 : i32
    %c0_i32_0 = arith.constant 0 : i32
    %c0_i32_1 = arith.constant 0 : i32
    %c0_i32_2 = arith.constant 0 : i32
    return %c0_i32, %c0_i32_0, %c0_i32_1 : i32, i32, i32
  }
  func.func @transform_9(%arg0: i32) -> (i32, i32, i32) {
    %c0_i32 = arith.constant 0 : i32
    %c0_i32_0 = arith.constant 0 : i32
    %c0_i32_1 = arith.constant 0 : i32
    %c0_i32_2 = arith.constant 0 : i32
    return %c0_i32, %c0_i32_0, %c0_i32_1 : i32, i32, i32
  }
  func.func @transform_10(%arg0: i32) -> (i32, i32, i32) {
    %c0_i32 = arith.constant 0 : i32
    %c0_i32_0 = arith.constant 0 : i32
    %c0_i32_1 = arith.constant 0 : i32
    %c0_i32_2 = arith.constant 0 : i32
    return %c0_i32, %c0_i32_0, %c0_i32_1 : i32, i32, i32
  }
  func.func @transform_11(%arg0: i32) -> (i32, i32) {
    %c0_i32 = arith.constant 0 : i32
    %c0_i32_0 = arith.constant 0 : i32
    return %arg0, %c0_i32 : i32, i32
  }
}

</mosaic_0001>

<llo_original>
// kernel: tpu_custom_call.1
$region0: #{tpu_custom_call.1}
  #allocation0 [shape = 'u32[]', space=smem, size = 0x4, offset = 0x4, fixed_abs, tag = 'smem constant byte address 0x4 - core index']
  #allocation1 [shape = 'u32[72,128]{1,0:T(1,128)}', space=vmem, size = 0x9000, scoped, tag = 'internal scratch']
  %s0 = inlined_call_operand.vmem [shape: f32[8,16], index: 0, kind: input, shape index: {}]
  %s1 = inlined_call_operand.vmem [shape: f32[4,16,64], index: 1, kind: input, shape index: {}]
  %s2 = inlined_call_operand.vmem [shape: f32[4,1,64], index: 2, kind: input, shape index: {}]
  %s3 = inlined_call_operand.vmem [shape: f32[4,64,64], index: 3, kind: input, shape index: {}]
  %s4 = inlined_call_operand.vmem [shape: f32[4,1,64], index: 4, kind: input, shape index: {}]
  %s5 = inlined_call_operand.hbm [shape: f32[4,64,64], index: 5, kind: input, shape index: {}]
  %s6 = inlined_call_operand.vmem [shape: f32[4,1,64], index: 6, kind: input, shape index: {}]
  %s7 = inlined_call_operand.hbm [shape: f32[4,64,64], index: 7, kind: input, shape index: {}]
  %s8 = inlined_call_operand.vmem [shape: f32[4,1,64], index: 8, kind: input, shape index: {}]
  %s9 = inlined_call_operand.vmem [shape: f32[4,64,32], index: 9, kind: input, shape index: {}]
  %s10 = inlined_call_operand.vmem [shape: f32[4,1,32], index: 10, kind: input, shape index: {}]
  %s11 = inlined_call_operand.hbm [shape: f32[8,16], index: 11, kind: output, shape index: {}]
  %s12 = sld [smem:[#allocation0]]
  $region62: #{tpu_custom_call.1} parent=0
    _
  %s14 = ssub.s32 1, %s12
  %s15 = scalar_select 0, %s14, %s12
  $region1: #{tpu_custom_call.1} parent=0
    #allocation2 [shape = 'u8[131072]{0}', space=vmem, size = 0x20000, scoped, tag = 'input window, operand 5, single buffered']
    #allocation3 [shape = 's32[1]{0}', space=sflag, size = 0x4, scoped, tag = 'scoped memory for tpu_custom_call.1']
    #allocation4 [shape = 's32[1]{0}', space=sflag, size = 0x4, scoped, tag = 'scoped memory for tpu_custom_call.1']
    #allocation5 [shape = 'u8[131072]{0}', space=vmem, size = 0x20000, scoped, tag = 'input window, operand 7, single buffered']
    #allocation6 [shape = 's32[1]{0}', space=sflag, size = 0x4, scoped, tag = 'scoped memory for tpu_custom_call.1']
    #allocation7 [shape = 'u8[4096]{0}', space=vmem, size = 0x1000, scoped, tag = 'output window, operand 0, single buffered']
    %16 = vsyncpa [#allocation3], 0
    %17 = vsyncpa [#allocation6], 0
    %18 = vsyncpa [#allocation4], 0
    // Predicated region
    $region2: #{tpu_custom_call.1} parent=1 // pred_check
      _
    $region3: #{tpu_custom_call.1} parent=1 // pred_check_branch
      %20 = sbr.rel (0) target = $region5
    $region4: #{tpu_custom_call.1} parent=1 // pred_region
      _
    $region5: #{tpu_custom_call.1} parent=1 // pred_fallthru
      _
    // Predicated region
    $region6: #{tpu_custom_call.1} parent=1 // pred_check
      _
    $region7: #{tpu_custom_call.1} parent=1 // pred_check_branch
      %22 = sbr.rel (0) target = $region9
    $region8: #{tpu_custom_call.1} parent=1 // pred_region
      _
    $region9: #{tpu_custom_call.1} parent=1 // pred_fallthru
      _
    // Predicated region
    $region10: #{tpu_custom_call.1} parent=1 // pred_check
      _
    $region11: #{tpu_custom_call.1} parent=1 // pred_check_branch
      %24 = sbr.rel (0) target = $region13
    $region12: #{tpu_custom_call.1} parent=1 // pred_region
      _
    $region13: #{tpu_custom_call.1} parent=1 // pred_fallthru
      _
    // Predicated region
    $region14: #{tpu_custom_call.1} parent=1 // pred_check
      _
    $region15: #{tpu_custom_call.1} parent=1 // pred_check_branch
      %26 = sbr.rel (0) target = $region17
    $region16: #{tpu_custom_call.1} parent=1 // pred_region
      _
    $region17: #{tpu_custom_call.1} parent=1 // pred_fallthru
      _
    // Predicated region
    $region18: #{tpu_custom_call.1} parent=1 // pred_check
      _
    $region19: #{tpu_custom_call.1} parent=1 // pred_check_branch
      %28 = sbr.rel (0) target = $region21
    $region20: #{tpu_custom_call.1} parent=1 // pred_region
      _
    $region21: #{tpu_custom_call.1} parent=1 // pred_fallthru
      _
    // Predicated region
    $region22: #{tpu_custom_call.1} parent=1 // pred_check
      _
    $region23: #{tpu_custom_call.1} parent=1 // pred_check_branch
      %30 = sbr.rel (0) target = $region25
    $region24: #{tpu_custom_call.1} parent=1 // pred_region
      %32 = vsyncadd [#allocation3], 0
      %s33 = sshll.u32 %s5, 4
      %s34 = int_to_ptr.hbm [resolvable:$true] %s33
      %s35 = sshll.u32 [#allocation2], 4
      %s36 = int_to_ptr.vmem [resolvable:$true] %s35
      %41 = dma.hbm_to_vmem [thread:$0]  %s34, 4096, %s36, [#allocation3], 128, 128, 8
    $region25: #{tpu_custom_call.1} parent=1 // pred_fallthru
      _
    // Predicated region
    $region26: #{tpu_custom_call.1} parent=1 // pred_check
      _
    $region27: #{tpu_custom_call.1} parent=1 // pred_check_branch
      %43 = sbr.rel (0) target = $region29
    $region28: #{tpu_custom_call.1} parent=1 // pred_region
      _
    $region29: #{tpu_custom_call.1} parent=1 // pred_fallthru
      _
    // Predicated region
    $region30: #{tpu_custom_call.1} parent=1 // pred_check
      _
    $region31: #{tpu_custom_call.1} parent=1 // pred_check_branch
      %45 = sbr.rel (0) target = $region33
    $region32: #{tpu_custom_call.1} parent=1 // pred_region
      %47 = vsyncadd [#allocation6], 0
      %s48 = sshll.u32 %s7, 4
      %s49 = int_to_ptr.hbm [resolvable:$true] %s48
      %s50 = sshll.u32 [#allocation5], 4
      %s51 = int_to_ptr.vmem [resolvable:$true] %s50
      %56 = dma.hbm_to_vmem [thread:$0]  %s49, 4096, %s51, [#allocation6], 128, 128, 8
    $region33: #{tpu_custom_call.1} parent=1 // pred_fallthru
      _
    // Predicated region
    $region34: #{tpu_custom_call.1} parent=1 // pred_check
      _
    $region35: #{tpu_custom_call.1} parent=1 // pred_check_branch
      %58 = sbr.rel (0) target = $region37
    $region36: #{tpu_custom_call.1} parent=1 // pred_region
      _
    $region37: #{tpu_custom_call.1} parent=1 // pred_fallthru
      _
    // Predicated region
    $region38: #{tpu_custom_call.1} parent=1 // pred_check
      _
    $region39: #{tpu_custom_call.1} parent=1 // pred_check_branch
      %60 = sbr.rel (0) target = $region41
    $region40: #{tpu_custom_call.1} parent=1 // pred_region
      _
    $region41: #{tpu_custom_call.1} parent=1 // pred_fallthru
      _
    // Predicated region
    $region42: #{tpu_custom_call.1} parent=1 // pred_check
      _
    $region43: #{tpu_custom_call.1} parent=1 // pred_check_branch
      %62 = sbr.rel (0) target = $region45
    $region44: #{tpu_custom_call.1} parent=1 // pred_region
      _
    $region45: #{tpu_custom_call.1} parent=1 // pred_fallthru
      _
    // Predicated region
    $region46: #{tpu_custom_call.1} parent=1 // pred_check
      _
    $region47: #{tpu_custom_call.1} parent=1 // pred_check_branch
      %64 = sbr.rel (0) target = $region49
    $region48: #{tpu_custom_call.1} parent=1 // pred_region
      %66 = dma.done [#allocation3], 4096
    $region49: #{tpu_custom_call.1} parent=1 // pred_fallthru
      _
    // Predicated region
    $region50: #{tpu_custom_call.1} parent=1 // pred_check
      _
    $region51: #{tpu_custom_call.1} parent=1 // pred_check_branch
      %68 = sbr.rel (0) target = $region53
    $region52: #{tpu_custom_call.1} parent=1 // pred_region
      %70 = dma.done [#allocation6], 4096
    $region53: #{tpu_custom_call.1} parent=1 // pred_fallthru
      _
    %v71 = vld [vmem:[%s0] sm:$0xff]
    %v72 = vld [vmem:[%s1] sm:$0xff]
    %v73 = vld [vmem:[%s1 + $0x8] sm:$0xff]
    %v74 = vld [vmem:[%s2] sm:$0x1]
    %v76 = vperm.slane %v74, 0
    %vm78 = vcmask 130048
    %v80 = vsel %vm78, %v71, 0
    %82 = vmatpush.msra.mxu0 0.0
    %83 = vmatpush.msra.mxu0 0.0
    %84 = vmatpush.msra.mxu0 0.0
    %85 = vmatpush.msra.mxu0 0.0
    %86 = vmatpush.msra.mxu0 0.0
    %87 = vmatpush.msra.mxu0 0.0
    %88 = vmatpush.msra.mxu0 0.0
    %89 = vmatpush.msra.mxu0 0.0
    %90 = vmatpush.msra.mxu0 0.0
    %91 = vmatpush.msra.mxu0 0.0
    %92 = vmatpush.msra.mxu0 0.0
    %93 = vmatpush.msra.mxu0 0.0
    %94 = vmatpush.msra.mxu0 0.0
    %95 = vmatpush.msra.mxu0 0.0
    %96 = vmatpush.msra.mxu0 %v73
    %97 = vmatpush.msra.mxu0 %v72
    %98 = vmatmul.f32.gmra.mxu0 %v80
    %v99 = vpop.f32.mrf.mxu0
    %v100 = vadd.f32 %v76, %v99
    %101 = vdwg.mxu0
    %v102 = vmax.f32 %v100, 0.0
    %v103 = vld [vmem:[%s3] sm:$0xff]
    %v104 = vld [vmem:[%s3 + $0x8] sm:$0xff]
    %v105 = vld [vmem:[%s3 + $0x10] sm:$0xff]
    %v106 = vld [vmem:[%s3 + $0x18] sm:$0xff]
    %v107 = vld [vmem:[%s3 + $0x20] sm:$0xff]
    %v108 = vld [vmem:[%s3 + $0x28] sm:$0xff]
    %v109 = vld [vmem:[%s3 + $0x30] sm:$0xff]
    %v110 = vld [vmem:[%s3 + $0x38] sm:$0xff]
    %v111 = vld [vmem:[%s4] sm:$0x1]
    %v113 = vperm.slane %v111, 0
    %vm115 = vcmask 523264
    %v117 = vsel %vm115, %v102, 0
    %119 = vmatpush.msra.mxu0 0.0
    %120 = vmatpush.msra.mxu0 0.0
    %121 = vmatpush.msra.mxu0 0.0
    %122 = vmatpush.msra.mxu0 0.0
    %123 = vmatpush.msra.mxu0 0.0
    %124 = vmatpush.msra.mxu0 0.0
    %125 = vmatpush.msra.mxu0 0.0
    %126 = vmatpush.msra.mxu0 0.0
    %127 = vmatpush.msra.mxu0 %v110
    %128 = vmatpush.msra.mxu0 %v109
    %129 = vmatpush.msra.mxu0 %v108
    %130 = vmatpush.msra.mxu0 %v107
    %131 = vmatpush.msra.mxu0 %v106
    %132 = vmatpush.msra.mxu0 %v105
    %133 = vmatpush.msra.mxu0 %v104
    %134 = vmatpush.msra.mxu0 %v103
    %135 = vmatmul.f32.gmra.mxu0 %v117
    %v136 = vpop.f32.mrf.mxu0
    %v137 = vadd.f32 %v113, %v136
    %138 = vdwg.mxu0
    %v139 = vadd.f32 %v137, %v102
    %v140 = vmax.f32 %v139, 0.0
    %v141 = vld [vmem:[#allocation2] sm:$0xff]
    %v142 = vld [vmem:[#allocation2 + $0x8] sm:$0xff]
    %v143 = vld [vmem:[#allocation2 + $0x10] sm:$0xff]
    %v144 = vld [vmem:[#allocation2 + $0x18] sm:$0xff]
    %v145 = vld [vmem:[#allocation2 + $0x20] sm:$0xff]
    %v146 = vld [vmem:[#allocation2 + $0x28] sm:$0xff]
    %v147 = vld [vmem:[#allocation2 + $0x30] sm:$0xff]
    %v148 = vld [vmem:[#allocation2 + $0x38] sm:$0xff]
    %v149 = vld [vmem:[%s6] sm:$0x1]
    %v151 = vperm.slane %v149, 0
    %v154 = vsel %vm115, %v140, 0
    %156 = vmatpush.msra.mxu0 0.0
    %157 = vmatpush.msra.mxu0 0.0
    %158 = vmatpush.msra.mxu0 0.0
    %159 = vmatpush.msra.mxu0 0.0
    %160 = vmatpush.msra.mxu0 0.0
    %161 = vmatpush.msra.mxu0 0.0
    %162 = vmatpush.msra.mxu0 0.0
    %163 = vmatpush.msra.mxu0 0.0
    %164 = vmatpush.msra.mxu0 %v148
    %165 = vmatpush.msra.mxu0 %v147
    %166 = vmatpush.msra.mxu0 %v146
    %167 = vmatpush.msra.mxu0 %v145
    %168 = vmatpush.msra.mxu0 %v144
    %169 = vmatpush.msra.mxu0 %v143
    %170 = vmatpush.msra.mxu0 %v142
    %171 = vmatpush.msra.mxu0 %v141
    %172 = vmatmul.f32.gmra.mxu0 %v154
    %v173 = vpop.f32.mrf.mxu0
    %v174 = vadd.f32 %v151, %v173
    %175 = vdwg.mxu0
    %v176 = vadd.f32 %v174, %v140
    %v177 = vmax.f32 %v176, 0.0
    %v178 = vld [vmem:[#allocation5] sm:$0xff]
    %v179 = vld [vmem:[#allocation5 + $0x8] sm:$0xff]
    %v180 = vld [vmem:[#allocation5 + $0x10] sm:$0xff]
    %v181 = vld [vmem:[#allocation5 + $0x18] sm:$0xff]
    %v182 = vld [vmem:[#allocation5 + $0x20] sm:$0xff]
    %v183 = vld [vmem:[#allocation5 + $0x28] sm:$0xff]
    %v184 = vld [vmem:[#allocation5 + $0x30] sm:$0xff]
    %v185 = vld [vmem:[#allocation5 + $0x38] sm:$0xff]
    %v186 = vld [vmem:[%s8] sm:$0x1]
    %v188 = vperm.slane %v186, 0
    %v191 = vsel %vm115, %v177, 0
    %193 = vmatpush.msra.mxu0 0.0
    %194 = vmatpush.msra.mxu0 0.0
    %195 = vmatpush.msra.mxu0 0.0
    %196 = vmatpush.msra.mxu0 0.0
    %197 = vmatpush.msra.mxu0 0.0
    %198 = vmatpush.msra.mxu0 0.0
    %199 = vmatpush.msra.mxu0 0.0
    %200 = vmatpush.msra.mxu0 0.0
    %201 = vmatpush.msra.mxu0 %v185
    %202 = vmatpush.msra.mxu0 %v184
    %203 = vmatpush.msra.mxu0 %v183
    %204 = vmatpush.msra.mxu0 %v182
    %205 = vmatpush.msra.mxu0 %v181
    %206 = vmatpush.msra.mxu0 %v180
    %207 = vmatpush.msra.mxu0 %v179
    %208 = vmatpush.msra.mxu0 %v178
    %209 = vmatmul.f32.gmra.mxu0 %v191
    %v210 = vpop.f32.mrf.mxu0
    %v211 = vadd.f32 %v188, %v210
    %212 = vdwg.mxu0
    %v213 = vadd.f32 %v211, %v177
    %v214 = vmax.f32 %v213, 0.0
    %v215 = vld [vmem:[%s9] sm:$0xff]
    %v216 = vld [vmem:[%s9 + $0x8] sm:$0xff]
    %v217 = vld [vmem:[%s9 + $0x10] sm:$0xff]
    %v218 = vld [vmem:[%s9 + $0x18] sm:$0xff]
    %v219 = vld [vmem:[%s9 + $0x20] sm:$0xff]
    %v220 = vld [vmem:[%s9 + $0x28] sm:$0xff]
    %v221 = vld [vmem:[%s9 + $0x30] sm:$0xff]
    %v222 = vld [vmem:[%s9 + $0x38] sm:$0xff]
    %v223 = vld [vmem:[%s10] sm:$0x1]
    %v225 = vperm.slane %v223, 0
    %v228 = vsel %vm115, %v214, 0
    %230 = vmatpush.msra.mxu0 0.0
    %231 = vmatpush.msra.mxu0 0.0
    %232 = vmatpush.msra.mxu0 0.0
    %233 = vmatpush.msra.mxu0 0.0
    %234 = vmatpush.msra.mxu0 0.0
    %235 = vmatpush.msra.mxu0 0.0
    %236 = vmatpush.msra.mxu0 0.0
    %237 = vmatpush.msra.mxu0 0.0
    %238 = vmatpush.msra.mxu0 %v222
    %239 = vmatpush.msra.mxu0 %v221
    %240 = vmatpush.msra.mxu0 %v220
    %241 = vmatpush.msra.mxu0 %v219
    %242 = vmatpush.msra.mxu0 %v218
    %243 = vmatpush.msra.mxu0 %v217
    %244 = vmatpush.msra.mxu0 %v216
    %245 = vmatpush.msra.mxu0 %v215
    %246 = vmatmul.f32.gmra.mxu0 %v228
    %v247 = vpop.f32.mrf.mxu0
    %v248 = vadd.f32 %v225, %v247
    %249 = vdwg.mxu0
    %v250 = vadd.f32 %v248, 0.0
    %252 = vrot.lane.b32.xlu0 %v248, 112
    %v253 = vpop.permute.xlu0 %252
    %v255 = vsub.f32 %v71, %v253
    %s256 = scalar_lea.vmem %s1, 16
    %v257 = vld [vmem:[%s256] sm:$0xff]
    %v258 = vld [vmem:[%s256 + $0x8] sm:$0xff]
    %s259 = scalar_lea.vmem %s2, 1
    %v260 = vld [vmem:[%s259] sm:$0x1]
    %v262 = vperm.slane %v260, 0
    %v265 = vsel %vm78, %v255, 0
    %267 = vmatpush.msra.mxu0 0.0
    %268 = vmatpush.msra.mxu0 0.0
    %269 = vmatpush.msra.mxu0 0.0
    %270 = vmatpush.msra.mxu0 0.0
    %271 = vmatpush.msra.mxu0 0.0
    %272 = vmatpush.msra.mxu0 0.0
    %273 = vmatpush.msra.mxu0 0.0
    %274 = vmatpush.msra.mxu0 0.0
    %275 = vmatpush.msra.mxu0 0.0
    %276 = vmatpush.msra.mxu0 0.0
    %277 = vmatpush.msra.mxu0 0.0
    %278 = vmatpush.msra.mxu0 0.0
    %279 = vmatpush.msra.mxu0 0.0
    %280 = vmatpush.msra.mxu0 0.0
    %281 = vmatpush.msra.mxu0 %v258
    %282 = vmatpush.msra.mxu0 %v257
    %283 = vmatmul.f32.gmra.mxu0 %v265
    %v284 = vpop.f32.mrf.mxu0
    %v285 = vadd.f32 %v262, %v284
    %286 = vdwg.mxu0
    %v287 = vmax.f32 %v285, 0.0
    %s288 = scalar_lea.vmem %s3, 64
    %v289 = vld [vmem:[%s288] sm:$0xff]
    %v290 = vld [vmem:[%s288 + $0x8] sm:$0xff]
    %v291 = vld [vmem:[%s288 + $0x10] sm:$0xff]
    %v292 = vld [vmem:[%s288 + $0x18] sm:$0xff]
    %v293 = vld [vmem:[%s288 + $0x20] sm:$0xff]
    %v294 = vld [vmem:[%s288 + $0x28] sm:$0xff]
    %v295 = vld [vmem:[%s288 + $0x30] sm:$0xff]
    %v296 = vld [vmem:[%s288 + $0x38] sm:$0xff]
    %s297 = scalar_lea.vmem %s4, 1
    %v298 = vld [vmem:[%s297] sm:$0x1]
    %v300 = vperm.slane %v298, 0
    %v303 = vsel %vm115, %v287, 0
    %305 = vmatpush.msra.mxu0 0.0
    %306 = vmatpush.msra.mxu0 0.0
    %307 = vmatpush.msra.mxu0 0.0
    %308 = vmatpush.msra.mxu0 0.0
    %309 = vmatpush.msra.mxu0 0.0
    %310 = vmatpush.msra.mxu0 0.0
    %311 = vmatpush.msra.mxu0 0.0
    %312 = vmatpush.msra.mxu0 0.0
    %313 = vmatpush.msra.mxu0 %v296
    %314 = vmatpush.msra.mxu0 %v295
    %315 = vmatpush.msra.mxu0 %v294
    %316 = vmatpush.msra.mxu0 %v293
    %317 = vmatpush.msra.mxu0 %v292
    %318 = vmatpush.msra.mxu0 %v291
    %319 = vmatpush.msra.mxu0 %v290
    %320 = vmatpush.msra.mxu0 %v289
    %321 = vmatmul.f32.gmra.mxu0 %v303
    %v322 = vpop.f32.mrf.mxu0
    %v323 = vadd.f32 %v300, %v322
    %324 = vdwg.mxu0
    %v325 = vadd.f32 %v323, %v287
    %v326 = vmax.f32 %v325, 0.0
    %s327 = scalar_lea.vmem [#allocation2], 64
    %v328 = vld [vmem:[%s327] sm:$0xff]
    %v329 = vld [vmem:[%s327 + $0x8] sm:$0xff]
    %v330 = vld [vmem:[%s327 + $0x10] sm:$0xff]
    %v331 = vld [vmem:[%s327 + $0x18] sm:$0xff]
    %v332 = vld [vmem:[%s327 + $0x20] sm:$0xff]
    %v333 = vld [vmem:[%s327 + $0x28] sm:$0xff]
    %v334 = vld [vmem:[%s327 + $0x30] sm:$0xff]
    %v335 = vld [vmem:[%s327 + $0x38] sm:$0xff]
    %s336 = scalar_lea.vmem %s6, 1
    %v337 = vld [vmem:[%s336] sm:$0x1]
    %v339 = vperm.slane %v337, 0
    %v342 = vsel %vm115, %v326, 0
    %344 = vmatpush.msra.mxu0 0.0
    %345 = vmatpush.msra.mxu0 0.0
    %346 = vmatpush.msra.mxu0 0.0
    %347 = vmatpush.msra.mxu0 0.0
    %348 = vmatpush.msra.mxu0 0.0
    %349 = vmatpush.msra.mxu0 0.0
    %350 = vmatpush.msra.mxu0 0.0
    %351 = vmatpush.msra.mxu0 0.0
    %352 = vmatpush.msra.mxu0 %v335
    %353 = vmatpush.msra.mxu0 %v334
    %354 = vmatpush.msra.mxu0 %v333
    %355 = vmatpush.msra.mxu0 %v332
    %356 = vmatpush.msra.mxu0 %v331
    %357 = vmatpush.msra.mxu0 %v330
    %358 = vmatpush.msra.mxu0 %v329
    %359 = vmatpush.msra.mxu0 %v328
    %360 = vmatmul.f32.gmra.mxu0 %v342
    %v361 = vpop.f32.mrf.mxu0
    %v362 = vadd.f32 %v339, %v361
    %363 = vdwg.mxu0
    %v364 = vadd.f32 %v362, %v326
    %v365 = vmax.f32 %v364, 0.0
    %s366 = scalar_lea.vmem [#allocation5], 64
    %v367 = vld [vmem:[%s366] sm:$0xff]
    %v368 = vld [vmem:[%s366 + $0x8] sm:$0xff]
    %v369 = vld [vmem:[%s366 + $0x10] sm:$0xff]
    %v370 = vld [vmem:[%s366 + $0x18] sm:$0xff]
    %v371 = vld [vmem:[%s366 + $0x20] sm:$0xff]
    %v372 = vld [vmem:[%s366 + $0x28] sm:$0xff]
    %v373 = vld [vmem:[%s366 + $0x30] sm:$0xff]
    %v374 = vld [vmem:[%s366 + $0x38] sm:$0xff]
    %s375 = scalar_lea.vmem %s8, 1
    %v376 = vld [vmem:[%s375] sm:$0x1]
    %v378 = vperm.slane %v376, 0
    %v381 = vsel %vm115, %v365, 0
    %383 = vmatpush.msra.mxu0 0.0
    %384 = vmatpush.msra.mxu0 0.0
    %385 = vmatpush.msra.mxu0 0.0
    %386 = vmatpush.msra.mxu0 0.0
    %387 = vmatpush.msra.mxu0 0.0
    %388 = vmatpush.msra.mxu0 0.0
    %389 = vmatpush.msra.mxu0 0.0
    %390 = vmatpush.msra.mxu0 0.0
    %391 = vmatpush.msra.mxu0 %v374
    %392 = vmatpush.msra.mxu0 %v373
    %393 = vmatpush.msra.mxu0 %v372
    %394 = vmatpush.msra.mxu0 %v371
    %395 = vmatpush.msra.mxu0 %v370
    %396 = vmatpush.msra.mxu0 %v369
    %397 = vmatpush.msra.mxu0 %v368
    %398 = vmatpush.msra.mxu0 %v367
    %399 = vmatmul.f32.gmra.mxu0 %v381
    %v400 = vpop.f32.mrf.mxu0
    %v401 = vadd.f32 %v378, %v400
    %402 = vdwg.mxu0
    %v403 = vadd.f32 %v401, %v365
    %v404 = vmax.f32 %v403, 0.0
    %s405 = scalar_lea.vmem %s9, 64
    %v406 = vld [vmem:[%s405] sm:$0xff]
    %v407 = vld [vmem:[%s405 + $0x8] sm:$0xff]
    %v408 = vld [vmem:[%s405 + $0x10] sm:$0xff]
    %v409 = vld [vmem:[%s405 + $0x18] sm:$0xff]
    %v410 = vld [vmem:[%s405 + $0x20] sm:$0xff]
    %v411 = vld [vmem:[%s405 + $0x28] sm:$0xff]
    %v412 = vld [vmem:[%s405 + $0x30] sm:$0xff]
    %v413 = vld [vmem:[%s405 + $0x38] sm:$0xff]
    %s414 = scalar_lea.vmem %s10, 1
    %v415 = vld [vmem:[%s414] sm:$0x1]
    %v417 = vperm.slane %v415, 0
    %v420 = vsel %vm115, %v404, 0
    %422 = vmatpush.msra.mxu0 0.0
    %423 = vmatpush.msra.mxu0 0.0
    %424 = vmatpush.msra.mxu0 0.0
    %425 = vmatpush.msra.mxu0 0.0
    %426 = vmatpush.msra.mxu0 0.0
    %427 = vmatpush.msra.mxu0 0.0
    %428 = vmatpush.msra.mxu0 0.0
    %429 = vmatpush.msra.mxu0 0.0
    %430 = vmatpush.msra.mxu0 %v413
    %431 = vmatpush.msra.mxu0 %v412
    %432 = vmatpush.msra.mxu0 %v411
    %433 = vmatpush.msra.mxu0 %v410
    %434 = vmatpush.msra.mxu0 %v409
    %435 = vmatpush.msra.mxu0 %v408
    %436 = vmatpush.msra.mxu0 %v407
    %437 = vmatpush.msra.mxu0 %v406
    %438 = vmatmul.f32.gmra.mxu0 %v420
    %v439 = vpop.f32.mrf.mxu0
    %v440 = vadd.f32 %v417, %v439
    %441 = vdwg.mxu0
    %v442 = vadd.f32 %v250, %v440
    %444 = vrot.lane.b32.xlu0 %v440, 112
    %v445 = vpop.permute.xlu0 %444
    %v447 = vsub.f32 %v71, %v445
    %s448 = scalar_lea.vmem %s1, 32
    %v449 = vld [vmem:[%s448] sm:$0xff]
    %v450 = vld [vmem:[%s448 + $0x8] sm:$0xff]
    %s451 = scalar_lea.vmem %s2, 2
    %v452 = vld [vmem:[%s451] sm:$0x1]
    %v454 = vperm.slane %v452, 0
    %v457 = vsel %vm78, %v447, 0
    %459 = vmatpush.msra.mxu0 0.0
    %460 = vmatpush.msra.mxu0 0.0
    %461 = vmatpush.msra.mxu0 0.0
    %462 = vmatpush.msra.mxu0 0.0
    %463 = vmatpush.msra.mxu0 0.0
    %464 = vmatpush.msra.mxu0 0.0
    %465 = vmatpush.msra.mxu0 0.0
    %466 = vmatpush.msra.mxu0 0.0
    %467 = vmatpush.msra.mxu0 0.0
    %468 = vmatpush.msra.mxu0 0.0
    %469 = vmatpush.msra.mxu0 0.0
    %470 = vmatpush.msra.mxu0 0.0
    %471 = vmatpush.msra.mxu0 0.0
    %472 = vmatpush.msra.mxu0 0.0
    %473 = vmatpush.msra.mxu0 %v450
    %474 = vmatpush.msra.mxu0 %v449
    %475 = vmatmul.f32.gmra.mxu0 %v457
    %v476 = vpop.f32.mrf.mxu0
    %v477 = vadd.f32 %v454, %v476
    %478 = vdwg.mxu0
    %v479 = vmax.f32 %v477, 0.0
    %s480 = scalar_lea.vmem %s3, 128
    %v481 = vld [vmem:[%s480] sm:$0xff]
    %v482 = vld [vmem:[%s480 + $0x8] sm:$0xff]
    %v483 = vld [vmem:[%s480 + $0x10] sm:$0xff]
    %v484 = vld [vmem:[%s480 + $0x18] sm:$0xff]
    %v485 = vld [vmem:[%s480 + $0x20] sm:$0xff]
    %v486 = vld [vmem:[%s480 + $0x28] sm:$0xff]
    %v487 = vld [vmem:[%s480 + $0x30] sm:$0xff]
    %v488 = vld [vmem:[%s480 + $0x38] sm:$0xff]
    %s489 = scalar_lea.vmem %s4, 2
    %v490 = vld [vmem:[%s489] sm:$0x1]
    %v492 = vperm.slane %v490, 0
    %v495 = vsel %vm115, %v479, 0
    %497 = vmatpush.msra.mxu0 0.0
    %498 = vmatpush.msra.mxu0 0.0
    %499 = vmatpush.msra.mxu0 0.0
    %500 = vmatpush.msra.mxu0 0.0
    %501 = vmatpush.msra.mxu0 0.0
    %502 = vmatpush.msra.mxu0 0.0
    %503 = vmatpush.msra.mxu0 0.0
    %504 = vmatpush.msra.mxu0 0.0
    %505 = vmatpush.msra.mxu0 %v488
    %506 = vmatpush.msra.mxu0 %v487
    %507 = vmatpush.msra.mxu0 %v486
    %508 = vmatpush.msra.mxu0 %v485
    %509 = vmatpush.msra.mxu0 %v484
    %510 = vmatpush.msra.mxu0 %v483
    %511 = vmatpush.msra.mxu0 %v482
    %512 = vmatpush.msra.mxu0 %v481
    %513 = vmatmul.f32.gmra.mxu0 %v495
    %v514 = vpop.f32.mrf.mxu0
    %v515 = vadd.f32 %v492, %v514
    %516 = vdwg.mxu0
    %v517 = vadd.f32 %v515, %v479
    %v518 = vmax.f32 %v517, 0.0
    %s519 = scalar_lea.vmem [#allocation2], 128
    %v520 = vld [vmem:[%s519] sm:$0xff]
    %v521 = vld [vmem:[%s519 + $0x8] sm:$0xff]
    %v522 = vld [vmem:[%s519 + $0x10] sm:$0xff]
    %v523 = vld [vmem:[%s519 + $0x18] sm:$0xff]
    %v524 = vld [vmem:[%s519 + $0x20] sm:$0xff]
    %v525 = vld [vmem:[%s519 + $0x28] sm:$0xff]
    %v526 = vld [vmem:[%s519 + $0x30] sm:$0xff]
    %v527 = vld [vmem:[%s519 + $0x38] sm:$0xff]
    %s528 = scalar_lea.vmem %s6, 2
    %v529 = vld [vmem:[%s528] sm:$0x1]
    %v531 = vperm.slane %v529, 0
    %v534 = vsel %vm115, %v518, 0
    %536 = vmatpush.msra.mxu0 0.0
    %537 = vmatpush.msra.mxu0 0.0
    %538 = vmatpush.msra.mxu0 0.0
    %539 = vmatpush.msra.mxu0 0.0
    %540 = vmatpush.msra.mxu0 0.0
    %541 = vmatpush.msra.mxu0 0.0
    %542 = vmatpush.msra.mxu0 0.0
    %543 = vmatpush.msra.mxu0 0.0
    %544 = vmatpush.msra.mxu0 %v527
    %545 = vmatpush.msra.mxu0 %v526
    %546 = vmatpush.msra.mxu0 %v525
    %547 = vmatpush.msra.mxu0 %v524
    %548 = vmatpush.msra.mxu0 %v523
    %549 = vmatpush.msra.mxu0 %v522
    %550 = vmatpush.msra.mxu0 %v521
    %551 = vmatpush.msra.mxu0 %v520
    %552 = vmatmul.f32.gmra.mxu0 %v534
    %v553 = vpop.f32.mrf.mxu0
    %v554 = vadd.f32 %v531, %v553
    %555 = vdwg.mxu0
    %v556 = vadd.f32 %v554, %v518
    %v557 = vmax.f32 %v556, 0.0
    %s558 = scalar_lea.vmem [#allocation5], 128
    %v559 = vld [vmem:[%s558] sm:$0xff]
    %v560 = vld [vmem:[%s558 + $0x8] sm:$0xff]
    %v561 = vld [vmem:[%s558 + $0x10] sm:$0xff]
    %v562 = vld [vmem:[%s558 + $0x18] sm:$0xff]
    %v563 = vld [vmem:[%s558 + $0x20] sm:$0xff]
    %v564 = vld [vmem:[%s558 + $0x28] sm:$0xff]
    %v565 = vld [vmem:[%s558 + $0x30] sm:$0xff]
    %v566 = vld [vmem:[%s558 + $0x38] sm:$0xff]
    %s567 = scalar_lea.vmem %s8, 2
    %v568 = vld [vmem:[%s567] sm:$0x1]
    %v570 = vperm.slane %v568, 0
    %v573 = vsel %vm115, %v557, 0
    %575 = vmatpush.msra.mxu0 0.0
    %576 = vmatpush.msra.mxu0 0.0
    %577 = vmatpush.msra.mxu0 0.0
    %578 = vmatpush.msra.mxu0 0.0
    %579 = vmatpush.msra.mxu0 0.0
    %580 = vmatpush.msra.mxu0 0.0
    %581 = vmatpush.msra.mxu0 0.0
    %582 = vmatpush.msra.mxu0 0.0
    %583 = vmatpush.msra.mxu0 %v566
    %584 = vmatpush.msra.mxu0 %v565
    %585 = vmatpush.msra.mxu0 %v564
    %586 = vmatpush.msra.mxu0 %v563
    %587 = vmatpush.msra.mxu0 %v562
    %588 = vmatpush.msra.mxu0 %v561
    %589 = vmatpush.msra.mxu0 %v560
    %590 = vmatpush.msra.mxu0 %v559
    %591 = vmatmul.f32.gmra.mxu0 %v573
    %v592 = vpop.f32.mrf.mxu0
    %v593 = vadd.f32 %v570, %v592
    %594 = vdwg.mxu0
    %v595 = vadd.f32 %v593, %v557
    %v596 = vmax.f32 %v595, 0.0
    %s597 = scalar_lea.vmem %s9, 128
    %v598 = vld [vmem:[%s597] sm:$0xff]
    %v599 = vld [vmem:[%s597 + $0x8] sm:$0xff]
    %v600 = vld [vmem:[%s597 + $0x10] sm:$0xff]
    %v601 = vld [vmem:[%s597 + $0x18] sm:$0xff]
    %v602 = vld [vmem:[%s597 + $0x20] sm:$0xff]
    %v603 = vld [vmem:[%s597 + $0x28] sm:$0xff]
    %v604 = vld [vmem:[%s597 + $0x30] sm:$0xff]
    %v605 = vld [vmem:[%s597 + $0x38] sm:$0xff]
    %s606 = scalar_lea.vmem %s10, 2
    %v607 = vld [vmem:[%s606] sm:$0x1]
    %v609 = vperm.slane %v607, 0
    %v612 = vsel %vm115, %v596, 0
    %614 = vmatpush.msra.mxu0 0.0
    %615 = vmatpush.msra.mxu0 0.0
    %616 = vmatpush.msra.mxu0 0.0
    %617 = vmatpush.msra.mxu0 0.0
    %618 = vmatpush.msra.mxu0 0.0
    %619 = vmatpush.msra.mxu0 0.0
    %620 = vmatpush.msra.mxu0 0.0
    %621 = vmatpush.msra.mxu0 0.0
    %622 = vmatpush.msra.mxu0 %v605
    %623 = vmatpush.msra.mxu0 %v604
    %624 = vmatpush.msra.mxu0 %v603
    %625 = vmatpush.msra.mxu0 %v602
    %626 = vmatpush.msra.mxu0 %v601
    %627 = vmatpush.msra.mxu0 %v600
    %628 = vmatpush.msra.mxu0 %v599
    %629 = vmatpush.msra.mxu0 %v598
    %630 = vmatmul.f32.gmra.mxu0 %v612
    %v631 = vpop.f32.mrf.mxu0
    %v632 = vadd.f32 %v609, %v631
    %633 = vdwg.mxu0
    %v634 = vadd.f32 %v442, %v632
    %636 = vrot.lane.b32.xlu0 %v632, 112
    %v637 = vpop.permute.xlu0 %636
    %v639 = vsub.f32 %v71, %v637
    %s640 = scalar_lea.vmem %s1, 48
    %v641 = vld [vmem:[%s640] sm:$0xff]
    %v642 = vld [vmem:[%s640 + $0x8] sm:$0xff]
    %s643 = scalar_lea.vmem %s2, 3
    %v644 = vld [vmem:[%s643] sm:$0x1]
    %v646 = vperm.slane %v644, 0
    %v649 = vsel %vm78, %v639, 0
    %651 = vmatpush.msra.mxu0 0.0
    %652 = vmatpush.msra.mxu0 0.0
    %653 = vmatpush.msra.mxu0 0.0
    %654 = vmatpush.msra.mxu0 0.0
    %655 = vmatpush.msra.mxu0 0.0
    %656 = vmatpush.msra.mxu0 0.0
    %657 = vmatpush.msra.mxu0 0.0
    %658 = vmatpush.msra.mxu0 0.0
    %659 = vmatpush.msra.mxu0 0.0
    %660 = vmatpush.msra.mxu0 0.0
    %661 = vmatpush.msra.mxu0 0.0
    %662 = vmatpush.msra.mxu0 0.0
    %663 = vmatpush.msra.mxu0 0.0
    %664 = vmatpush.msra.mxu0 0.0
    %665 = vmatpush.msra.mxu0 %v642
    %666 = vmatpush.msra.mxu0 %v641
    %667 = vmatmul.f32.gmra.mxu0 %v649
    %v668 = vpop.f32.mrf.mxu0
    %v669 = vadd.f32 %v646, %v668
    %670 = vdwg.mxu0
    %v671 = vmax.f32 %v669, 0.0
    %s672 = scalar_lea.vmem %s3, 192
    %v673 = vld [vmem:[%s672] sm:$0xff]
    %v674 = vld [vmem:[%s672 + $0x8] sm:$0xff]
    %v675 = vld [vmem:[%s672 + $0x10] sm:$0xff]
    %v676 = vld [vmem:[%s672 + $0x18] sm:$0xff]
    %v677 = vld [vmem:[%s672 + $0x20] sm:$0xff]
    %v678 = vld [vmem:[%s672 + $0x28] sm:$0xff]
    %v679 = vld [vmem:[%s672 + $0x30] sm:$0xff]
    %v680 = vld [vmem:[%s672 + $0x38] sm:$0xff]
    %s681 = scalar_lea.vmem %s4, 3
    %v682 = vld [vmem:[%s681] sm:$0x1]
    %v684 = vperm.slane %v682, 0
    %v687 = vsel %vm115, %v671, 0
    %689 = vmatpush.msra.mxu0 0.0
    %690 = vmatpush.msra.mxu0 0.0
    %691 = vmatpush.msra.mxu0 0.0
    %692 = vmatpush.msra.mxu0 0.0
    %693 = vmatpush.msra.mxu0 0.0
    %694 = vmatpush.msra.mxu0 0.0
    %695 = vmatpush.msra.mxu0 0.0
    %696 = vmatpush.msra.mxu0 0.0
    %697 = vmatpush.msra.mxu0 %v680
    %698 = vmatpush.msra.mxu0 %v679
    %699 = vmatpush.msra.mxu0 %v678
    %700 = vmatpush.msra.mxu0 %v677
    %701 = vmatpush.msra.mxu0 %v676
    %702 = vmatpush.msra.mxu0 %v675
    %703 = vmatpush.msra.mxu0 %v674
    %704 = vmatpush.msra.mxu0 %v673
    %705 = vmatmul.f32.gmra.mxu0 %v687
    %v706 = vpop.f32.mrf.mxu0
    %v707 = vadd.f32 %v684, %v706
    %708 = vdwg.mxu0
    %v709 = vadd.f32 %v707, %v671
    %v710 = vmax.f32 %v709, 0.0
    %s711 = scalar_lea.vmem [#allocation2], 192
    %v712 = vld [vmem:[%s711] sm:$0xff]
    %v713 = vld [vmem:[%s711 + $0x8] sm:$0xff]
    %v714 = vld [vmem:[%s711 + $0x10] sm:$0xff]
    %v715 = vld [vmem:[%s711 + $0x18] sm:$0xff]
    %v716 = vld [vmem:[%s711 + $0x20] sm:$0xff]
    %v717 = vld [vmem:[%s711 + $0x28] sm:$0xff]
    %v718 = vld [vmem:[%s711 + $0x30] sm:$0xff]
    %v719 = vld [vmem:[%s711 + $0x38] sm:$0xff]
    %s720 = scalar_lea.vmem %s6, 3
    %v721 = vld [vmem:[%s720] sm:$0x1]
    %v723 = vperm.slane %v721, 0
    %v726 = vsel %vm115, %v710, 0
    %728 = vmatpush.msra.mxu0 0.0
    %729 = vmatpush.msra.mxu0 0.0
    %730 = vmatpush.msra.mxu0 0.0
    %731 = vmatpush.msra.mxu0 0.0
    %732 = vmatpush.msra.mxu0 0.0
    %733 = vmatpush.msra.mxu0 0.0
    %734 = vmatpush.msra.mxu0 0.0
    %735 = vmatpush.msra.mxu0 0.0
    %736 = vmatpush.msra.mxu0 %v719
    %737 = vmatpush.msra.mxu0 %v718
    %738 = vmatpush.msra.mxu0 %v717
    %739 = vmatpush.msra.mxu0 %v716
    %740 = vmatpush.msra.mxu0 %v715
    %741 = vmatpush.msra.mxu0 %v714
    %742 = vmatpush.msra.mxu0 %v713
    %743 = vmatpush.msra.mxu0 %v712
    %744 = vmatmul.f32.gmra.mxu0 %v726
    %v745 = vpop.f32.mrf.mxu0
    %v746 = vadd.f32 %v723, %v745
    %747 = vdwg.mxu0
    %v748 = vadd.f32 %v746, %v710
    %v749 = vmax.f32 %v748, 0.0
    %s750 = scalar_lea.vmem [#allocation5], 192
    %v751 = vld [vmem:[%s750] sm:$0xff]
    %v752 = vld [vmem:[%s750 + $0x8] sm:$0xff]
    %v753 = vld [vmem:[%s750 + $0x10] sm:$0xff]
    %v754 = vld [vmem:[%s750 + $0x18] sm:$0xff]
    %v755 = vld [vmem:[%s750 + $0x20] sm:$0xff]
    %v756 = vld [vmem:[%s750 + $0x28] sm:$0xff]
    %v757 = vld [vmem:[%s750 + $0x30] sm:$0xff]
    %v758 = vld [vmem:[%s750 + $0x38] sm:$0xff]
    %s759 = scalar_lea.vmem %s8, 3
    %v760 = vld [vmem:[%s759] sm:$0x1]
    %v762 = vperm.slane %v760, 0
    %v765 = vsel %vm115, %v749, 0
    %767 = vmatpush.msra.mxu0 0.0
    %768 = vmatpush.msra.mxu0 0.0
    %769 = vmatpush.msra.mxu0 0.0
    %770 = vmatpush.msra.mxu0 0.0
    %771 = vmatpush.msra.mxu0 0.0
    %772 = vmatpush.msra.mxu0 0.0
    %773 = vmatpush.msra.mxu0 0.0
    %774 = vmatpush.msra.mxu0 0.0
    %775 = vmatpush.msra.mxu0 %v758
    %776 = vmatpush.msra.mxu0 %v757
    %777 = vmatpush.msra.mxu0 %v756
    %778 = vmatpush.msra.mxu0 %v755
    %779 = vmatpush.msra.mxu0 %v754
    %780 = vmatpush.msra.mxu0 %v753
    %781 = vmatpush.msra.mxu0 %v752
    %782 = vmatpush.msra.mxu0 %v751
    %783 = vmatmul.f32.gmra.mxu0 %v765
    %v784 = vpop.f32.mrf.mxu0
    %v785 = vadd.f32 %v762, %v784
    %786 = vdwg.mxu0
    %v787 = vadd.f32 %v785, %v749
    %v788 = vmax.f32 %v787, 0.0
    %s789 = scalar_lea.vmem %s9, 192
    %v790 = vld [vmem:[%s789] sm:$0xff]
    %v791 = vld [vmem:[%s789 + $0x8] sm:$0xff]
    %v792 = vld [vmem:[%s789 + $0x10] sm:$0xff]
    %v793 = vld [vmem:[%s789 + $0x18] sm:$0xff]
    %v794 = vld [vmem:[%s789 + $0x20] sm:$0xff]
    %v795 = vld [vmem:[%s789 + $0x28] sm:$0xff]
    %v796 = vld [vmem:[%s789 + $0x30] sm:$0xff]
    %v797 = vld [vmem:[%s789 + $0x38] sm:$0xff]
    %s798 = scalar_lea.vmem %s10, 3
    %v799 = vld [vmem:[%s798] sm:$0x1]
    %v801 = vperm.slane %v799, 0
    %v804 = vsel %vm115, %v788, 0
    %806 = vmatpush.msra.mxu0 0.0
    %807 = vmatpush.msra.mxu0 0.0
    %808 = vmatpush.msra.mxu0 0.0
    %809 = vmatpush.msra.mxu0 0.0
    %810 = vmatpush.msra.mxu0 0.0
    %811 = vmatpush.msra.mxu0 0.0
    %812 = vmatpush.msra.mxu0 0.0
    %813 = vmatpush.msra.mxu0 0.0
    %814 = vmatpush.msra.mxu0 %v797
    %815 = vmatpush.msra.mxu0 %v796
    %816 = vmatpush.msra.mxu0 %v795
    %817 = vmatpush.msra.mxu0 %v794
    %818 = vmatpush.msra.mxu0 %v793
    %819 = vmatpush.msra.mxu0 %v792
    %820 = vmatpush.msra.mxu0 %v791
    %821 = vmatpush.msra.mxu0 %v790
    %822 = vmatmul.f32.gmra.mxu0 %v804
    %v823 = vpop.f32.mrf.mxu0
    %v824 = vadd.f32 %v801, %v823
    %825 = vdwg.mxu0
    %v826 = vadd.f32 %v634, %v824
    %827 = vst.msk [vmem:[#allocation7] sm:$0xff] %vm78, %v826
    // Predicated region
    $region54: #{tpu_custom_call.1} parent=1 // pred_check
      _
    $region55: #{tpu_custom_call.1} parent=1 // pred_check_branch
      %829 = sbr.rel (0) target = $region57
    $region56: #{tpu_custom_call.1} parent=1 // pred_region
      %831 = vsyncadd [#allocation4], 0
      %s833 = sshll.u32 [#allocation7], 4
      %s834 = int_to_ptr.vmem [resolvable:$true] %s833
      %s835 = sshll.u32 %s11, 4
      %s836 = int_to_ptr.hbm [resolvable:$true] %s835
      %838 = dma.vmem_to_hbm [thread:$0]  %s834, 128, %s836, [#allocation4]
    $region57: #{tpu_custom_call.1} parent=1 // pred_fallthru
      _
    // Predicated region
    $region58: #{tpu_custom_call.1} parent=1 // pred_check
      _
    $region59: #{tpu_custom_call.1} parent=1 // pred_check_branch
      %840 = sbr.rel (0) target = $region61
    $region60: #{tpu_custom_call.1} parent=1 // pred_region
      %842 = dma.done [#allocation4], 128
    $region61: #{tpu_custom_call.1} parent=1 // pred_fallthru
      _
    %843 = vsyncpa [#allocation3], 1
    %844 = vsyncpa [#allocation6], 1
    %845 = vsyncpa [#allocation4], 1

</llo_original>
